<compile_context>
chip_gen: v7x
topology: tpu7x:2x2x1
jax: 0.10.0
libtpu: 0.0.40
codegen_flags: <defaults>
</compile_context>

<pallas_src>
import functools

import jax
import jax.numpy as jnp
from jax.experimental import pallas as pl
from jax.experimental.pallas import tpu as pltpu


def _linear_attention_kernel(l_ref, g_ref, w_row_ref, w_sub_ref, c_ref, gout_ref,
                             *, normalize, inv_s):
    # l_ref:     (nb, C, S) local features (native dtype, possibly bf16)
    # g_ref:     (nb, C)    global descriptor (lane-dense)
    # w_row_ref: (1, C)     1x1-conv weight, lane layout (for the bias term)
    # w_sub_ref: (1, C, 1)  same weight, sublane layout (for the channel sum)
    # c_ref:     (nb, S)    compatibility scores (output, f32)
    # gout_ref:  (nb, C)    attended channel descriptor (output, f32)
    lf = l_ref[...].astype(jnp.float32)                      # (nb, C, S)
    g = g_ref[...].astype(jnp.float32)                       # (nb, C)
    w_row = w_row_ref[...].astype(jnp.float32)               # (1, C)
    w_sub = w_sub_ref[...].astype(jnp.float32)               # (1, C, 1)

    # conv1x1(l + g) with one output channel, no bias:
    #   c[n, s] = sum_c w_c * l[n, c, s] + sum_c w_c * g[n, c]
    # The second term is a per-batch scalar; l + g is never materialized.
    bias = jnp.sum(g * w_row, axis=-1, keepdims=True)        # (nb, 1)
    c = jnp.sum(lf * w_sub, axis=1) + bias                   # (nb, S)  VPU mul + sublane reduce

    if normalize:
        # Softmax over the flattened spatial axis; the normalizer is folded
        # into the C-sized descriptor (EUP approximate reciprocal) instead of
        # rescaling the S-long score row.
        m = jnp.max(c, axis=-1, keepdims=True)                # (nb, 1)
        e = jnp.exp(c - m)                                    # (nb, S)
        denom = jnp.sum(e, axis=-1, keepdims=True)            # (nb, 1)
        gout = jnp.sum(lf * e[:, None, :], axis=-1)           # (nb, C)  VPU mul + lane reduce
        gout = gout * pl.reciprocal(denom, approx=True)
    else:
        # sigmoid attention + adaptive_avg_pool2d(1, 1) == sum * (1 / S)
        a = jax.nn.sigmoid(c)                                 # (nb, S)
        gout = jnp.sum(lf * a[:, None, :], axis=-1) * inv_s   # (nb, C)

    c_ref[...] = c.astype(c_ref.dtype)
    gout_ref[...] = gout.astype(gout_ref.dtype)


def linear_attention_map(l_nchw, g_nc11, weight, normalize=True, block_n=8,
                         compute_dtype=None):
    """Pallas implementation of LinearAttentionMap.forward.

    Args:
      l_nchw: (N, C, W, H) local features.
      g_nc11: (N, C, 1, 1) global image descriptor.
      weight: (1, C, 1, 1) weight of the 1x1 conv (bias=False).
      normalize: softmax (True) or sigmoid + spatial mean (False) attention.
      block_n: max batch elements per grid step.
      compute_dtype: optional dtype for the streamed l slab (e.g. bf16 to
        halve HBM traffic); in-kernel math and outputs stay f32.
    Returns:
      c: (N, 1, W, H) compatibility scores (f32), g: (N, C) descriptor (f32).
    """
    N, C, W, H = l_nchw.shape
    S = W * H
    if compute_dtype is not None:
        l_nchw = l_nchw.astype(compute_dtype)
    elt = jnp.dtype(l_nchw.dtype).itemsize

    # --- generation-aware VMEM budget -> batch block size nb ----------------
    try:
        vmem_cap = int(getattr(pltpu.get_tpu_info(), "vmem_capacity_bytes",
                               64 * 1024 * 1024))
    except Exception:
        vmem_cap = 64 * 1024 * 1024                      # conservative (v7x)
    vmem_limit = int(max(32 * 1024 * 1024,
                         min((3 * vmem_cap) // 4, 100 * 1024 * 1024)))

    sub = 8 if elt >= 4 else (16 if elt == 2 else 32)    # sublane tile
    c_pad = ((C + sub - 1) // sub) * sub                 # l sublane padding in VMEM
    # per batch element: double-buffered l block + f32 working copy + temps
    per_n = c_pad * S * (2 * elt + 3 * 4) + 8 * S * 4 + 8 * C * 4
    nb_cap = max(1, (vmem_limit // 2) // per_n)
    # keep the grid >= 2 steps (pipeline overlap + both v7x TensorCores busy)
    nb_target = max(1, min(block_n, nb_cap, max(1, N // 2)))
    nb = 1
    for cand in range(min(nb_target, N), 0, -1):         # largest divisor of N
        if N % cand == 0:
            nb = cand
            break
    n_grid = N // nb

    # Free (leading-dim-split) views; no HBM copies of l.
    l_v = l_nchw.reshape(n_grid, nb, C, S)
    g_v = g_nc11.reshape(n_grid, nb, C)
    w_row = weight.reshape(1, C).astype(jnp.float32)
    w_sub = weight.reshape(1, C, 1).astype(jnp.float32)

    kernel = functools.partial(_linear_attention_kernel,
                               normalize=normalize, inv_s=float(1.0 / S))

    in_bytes = l_nchw.size * elt + g_v.size * g_v.dtype.itemsize + 2 * C * 4
    out_bytes = N * S * 4 + N * C * 4
    cost = pl.CostEstimate(flops=int(4 * N * C * S + 8 * N * S),
                           transcendentals=int(N * S),
                           bytes_accessed=int(in_bytes + out_bytes))

    c_out, g_out = pl.pallas_call(
        kernel,
        out_shape=(
            jax.ShapeDtypeStruct((n_grid, nb, S), jnp.float32),
            jax.ShapeDtypeStruct((n_grid, nb, C), jnp.float32),
        ),
        grid_spec=pltpu.PrefetchScalarGridSpec(
            num_scalar_prefetch=0,
            grid=(n_grid,),
            in_specs=[
                pl.BlockSpec((None, nb, C, S), lambda i: (i, 0, 0, 0)),
                pl.BlockSpec((None, nb, C), lambda i: (i, 0, 0)),
                pl.BlockSpec((1, C), lambda i: (0, 0)),
                pl.BlockSpec((1, C, 1), lambda i: (0, 0, 0)),
            ],
            out_specs=[
                pl.BlockSpec((None, nb, S), lambda i: (i, 0, 0)),
                pl.BlockSpec((None, nb, C), lambda i: (i, 0, 0)),
            ],
        ),
        compiler_params=pltpu.CompilerParams(
            dimension_semantics=("parallel",),
            vmem_limit_bytes=vmem_limit,
        ),
        cost_estimate=cost,
    )(l_v, g_v, w_row, w_sub)

    c_out = c_out.reshape(N, 1, W, H)
    g_out = g_out.reshape(N, C)
    return c_out, g_out


def _reference(l, g, weight, normalize=True):
    """Plain-JAX (elementwise, full-f32) mirror of the PyTorch forward."""
    N, C, W, H = l.shape
    wv = weight.reshape(1, C, 1, 1)
    x = l + g                                           # (N, C, W, H)
    c = jnp.sum(x * wv, axis=1, keepdims=True)          # (N, 1, W, H)
    if normalize:
        a = jax.nn.softmax(c.reshape(N, 1, -1), axis=2).reshape(N, 1, W, H)
        gout = (a * l).reshape(N, C, -1).sum(axis=2)
    else:
        a = jax.nn.sigmoid(c)
        gout = (a * l).mean(axis=(2, 3))
    return c, gout


if __name__ == "__main__":
    N, C, W, H = 2, 4, 16, 16

    key = jax.random.PRNGKey(0)
    k_l, k_g, k_w = jax.random.split(key, 3)
    l = jax.random.normal(k_l, (N, C, W, H), dtype=jnp.float32)
    g = jax.random.normal(k_g, (N, C, 1, 1), dtype=jnp.float32)
    # Deterministic init for the Conv2d(C, 1, kernel_size=1, bias=False) weight.
    weight = jax.random.normal(k_w, (1, C, 1, 1), dtype=jnp.float32) * 0.5

    # f32 path: the only approximation vs. the exact elementwise reference is
    # the EUP approximate reciprocal of the softmax normalizer.
    for norm in (True, False):
        c_ker, g_ker = linear_attention_map(l, g, weight, normalize=norm)
        jax.block_until_ready((c_ker, g_ker))
        c_ref, g_ref = _reference(l, g, weight, normalize=norm)
        assert c_ker.shape == (N, 1, W, H) and g_ker.shape == (N, C)
        assert jnp.allclose(c_ker, c_ref, atol=1e-2, rtol=1e-2), norm
        assert jnp.allclose(g_ker, g_ref, atol=1e-2, rtol=1e-2), norm

    # bf16 streamed-l path (halves the HBM traffic of the memory-bound slab);
    # loose tolerance since l itself is quantized vs. the f32 reference input.
    c_bf, g_bf = linear_attention_map(l, g, weight, normalize=True,
                                      compute_dtype=jnp.bfloat16)
    jax.block_until_ready((c_bf, g_bf))
    c_ref, g_ref = _reference(l, g, weight, normalize=True)
    assert c_bf.shape == (N, 1, W, H) and g_bf.shape == (N, C)
    assert jnp.allclose(c_bf, c_ref, atol=1e-1, rtol=1e-1)
    assert jnp.allclose(g_bf, g_ref, atol=1e-1, rtol=1e-1)

    print("KERNEL_OK")
</pallas_src>

<mosaic_0001>
module attributes {stable_mosaic.version = 11 : i64} {
  func.func @_linear_attention_kernel(%arg0: i32, %arg1: memref<1x1x4x256xf32, #tpu.memory_space<vmem>>, %arg2: memref<1x1x4xf32, #tpu.memory_space<vmem>>, %arg3: memref<1x4xf32, #tpu.memory_space<vmem>>, %arg4: memref<1x4x1xf32, #tpu.memory_space<vmem>>, %arg5: memref<1x1x256xf32, #tpu.memory_space<vmem>>, %arg6: memref<1x1x4xf32, #tpu.memory_space<vmem>>) attributes {dimension_semantics = [#tpu.dimension_semantics<parallel>], iteration_bounds = array<i64: 2>, scalar_prefetch = 0 : i64, scratch_operands = 0 : i64, tpu.core_type = #tpu.core_type<tc>, window_params = [{transform_indices = @transform_0, window_bounds = array<i64: 1, 1, 4, 256>}, {transform_indices = @transform_1, window_bounds = array<i64: 1, 1, 4>}, {pipeline_mode = #tpu.pipeline_mode<synchronous>, transform_indices = @transform_2, window_bounds = array<i64: 1, 4>}, {pipeline_mode = #tpu.pipeline_mode<synchronous>, transform_indices = @transform_3, window_bounds = array<i64: 1, 4, 1>}, {transform_indices = @transform_4, window_bounds = array<i64: 1, 1, 256>}, {transform_indices = @transform_5, window_bounds = array<i64: 1, 1, 4>}]} {
    %c0 = arith.constant 0 : index
    %c0_0 = arith.constant 0 : index
    %c0_1 = arith.constant 0 : index
    %c0_2 = arith.constant 0 : index
    %0 = vector.load %arg1[%c0, %c0_0, %c0_1, %c0_2] : memref<1x1x4x256xf32, #tpu.memory_space<vmem>>, vector<1x1x4x256xf32>
    %1 = vector.shape_cast %0 : vector<1x1x4x256xf32> to vector<1x4x256xf32>
    %c0_3 = arith.constant 0 : index
    %c0_4 = arith.constant 0 : index
    %c0_5 = arith.constant 0 : index
    %2 = vector.load %arg2[%c0_3, %c0_4, %c0_5] : memref<1x1x4xf32, #tpu.memory_space<vmem>>, vector<1x1x4xf32>
    %3 = vector.shape_cast %2 : vector<1x1x4xf32> to vector<1x4xf32>
    %c0_6 = arith.constant 0 : index
    %c0_7 = arith.constant 0 : index
    %4 = vector.load %arg3[%c0_6, %c0_7] : memref<1x4xf32, #tpu.memory_space<vmem>>, vector<1x4xf32>
    %c0_8 = arith.constant 0 : index
    %c0_9 = arith.constant 0 : index
    %c0_10 = arith.constant 0 : index
    %5 = vector.load %arg4[%c0_8, %c0_9, %c0_10] : memref<1x4x1xf32, #tpu.memory_space<vmem>>, vector<1x4x1xf32>
    %6 = arith.mulf %3, %4 : vector<1x4xf32>
    %cst = arith.constant dense<0.000000e+00> : vector<1xf32>
    %7 = vector.multi_reduction <add>, %6, %cst [1] : vector<1x4xf32> to vector<1xf32>
    %8 = vector.shape_cast %7 : vector<1xf32> to vector<1x1xf32>
    %9 = vector.broadcast %5 : vector<1x4x1xf32> to vector<1x4x256xf32>
    %10 = arith.mulf %1, %9 : vector<1x4x256xf32>
    %cst_11 = arith.constant dense<0.000000e+00> : vector<1x256xf32>
    %11 = vector.multi_reduction <add>, %10, %cst_11 [1] : vector<1x4x256xf32> to vector<1x256xf32>
    %12 = vector.broadcast %8 : vector<1x1xf32> to vector<1x256xf32>
    %13 = arith.addf %11, %12 : vector<1x256xf32>
    %cst_12 = arith.constant dense<0xFF800000> : vector<1xf32>
    %14 = vector.multi_reduction <maximumf>, %13, %cst_12 [1] : vector<1x256xf32> to vector<1xf32>
    %15 = vector.shape_cast %14 : vector<1xf32> to vector<1x1xf32>
    %16 = vector.broadcast %15 : vector<1x1xf32> to vector<1x256xf32>
    %17 = arith.subf %13, %16 : vector<1x256xf32>
    %18 = math.exp %17 : vector<1x256xf32>
    %cst_13 = arith.constant dense<0.000000e+00> : vector<1xf32>
    %19 = vector.multi_reduction <add>, %18, %cst_13 [1] : vector<1x256xf32> to vector<1xf32>
    %20 = vector.shape_cast %19 : vector<1xf32> to vector<1x1xf32>
    %21 = vector.shape_cast %18 : vector<1x256xf32> to vector<1x1x256xf32>
    %22 = vector.broadcast %21 : vector<1x1x256xf32> to vector<1x4x256xf32>
    %23 = arith.mulf %1, %22 : vector<1x4x256xf32>
    %cst_14 = arith.constant dense<0.000000e+00> : vector<1x4xf32>
    %24 = vector.multi_reduction <add>, %23, %cst_14 [2] : vector<1x4x256xf32> to vector<1x4xf32>
    %25 = tpu.reciprocal %20 {approx = true} : vector<1x1xf32> -> vector<1x1xf32>
    %26 = vector.broadcast %25 : vector<1x1xf32> to vector<1x4xf32>
    %27 = arith.mulf %24, %26 : vector<1x4xf32>
    %c0_15 = arith.constant 0 : index
    %c0_16 = arith.constant 0 : index
    %c0_17 = arith.constant 0 : index
    %28 = vector.load %arg5[%c0_15, %c0_16, %c0_17] : memref<1x1x256xf32, #tpu.memory_space<vmem>>, vector<1x1x256xf32>
    %29 = vector.shape_cast %28 : vector<1x1x256xf32> to vector<1x256xf32>
    %30 = vector.shape_cast %13 : vector<1x256xf32> to vector<1x1x256xf32>
    tpu.vector_store %arg5[%c0_15, %c0_16, %c0_17], %30 {strides = array<i32>} : memref<1x1x256xf32, #tpu.memory_space<vmem>>, vector<1x1x256xf32>,
    %c0_18 = arith.constant 0 : index
    %c0_19 = arith.constant 0 : index
    %c0_20 = arith.constant 0 : index
    %31 = vector.load %arg6[%c0_18, %c0_19, %c0_20] : memref<1x1x4xf32, #tpu.memory_space<vmem>>, vector<1x1x4xf32>
    %32 = vector.shape_cast %31 : vector<1x1x4xf32> to vector<1x4xf32>
    %33 = vector.shape_cast %27 : vector<1x4xf32> to vector<1x1x4xf32>
    tpu.vector_store %arg6[%c0_18, %c0_19, %c0_20], %33 {strides = array<i32>} : memref<1x1x4xf32, #tpu.memory_space<vmem>>, vector<1x1x4xf32>,
    return
  }
  func.func @transform_0(%arg0: i32) -> (i32, i32, i32, i32) {
    %c0_i32 = arith.constant 0 : i32
    %c0_i32_0 = arith.constant 0 : i32
    %c0_i32_1 = arith.constant 0 : i32
    %c0_i32_2 = arith.constant 0 : i32
    return %arg0, %c0_i32, %c0_i32_0, %c0_i32_1 : i32, i32, i32, i32
  }
  func.func @transform_1(%arg0: i32) -> (i32, i32, i32) {
    %c0_i32 = arith.constant 0 : i32
    %c0_i32_0 = arith.constant 0 : i32
    %c0_i32_1 = arith.constant 0 : i32
    return %arg0, %c0_i32, %c0_i32_0 : i32, i32, i32
  }
  func.func @transform_2(%arg0: i32) -> (i32, i32) {
    %c0_i32 = arith.constant 0 : i32
    %c0_i32_0 = arith.constant 0 : i32
    %c0_i32_1 = arith.constant 0 : i32
    return %c0_i32, %c0_i32_0 : i32, i32
  }
  func.func @transform_3(%arg0: i32) -> (i32, i32, i32) {
    %c0_i32 = arith.constant 0 : i32
    %c0_i32_0 = arith.constant 0 : i32
    %c0_i32_1 = arith.constant 0 : i32
    %c0_i32_2 = arith.constant 0 : i32
    return %c0_i32, %c0_i32_0, %c0_i32_1 : i32, i32, i32
  }
  func.func @transform_4(%arg0: i32) -> (i32, i32, i32) {
    %c0_i32 = arith.constant 0 : i32
    %c0_i32_0 = arith.constant 0 : i32
    %c0_i32_1 = arith.constant 0 : i32
    return %arg0, %c0_i32, %c0_i32_0 : i32, i32, i32
  }
  func.func @transform_5(%arg0: i32) -> (i32, i32, i32) {
    %c0_i32 = arith.constant 0 : i32
    %c0_i32_0 = arith.constant 0 : i32
    %c0_i32_1 = arith.constant 0 : i32
    return %arg0, %c0_i32, %c0_i32_0 : i32, i32, i32
  }
}

</mosaic_0001>

<llo_original>
// kernel: tpu_custom_call.1
$region0: #{tpu_custom_call.1}
  #allocation0 [shape = 'u32[]', space=smem, size = 0x4, offset = 0x4, fixed_abs, tag = 'smem constant byte address 0x4 - core index']
  #allocation1 [shape = 'u32[144,128]{1,0:T(1,128)}', space=vmem, size = 0x12000, scoped, tag = 'internal scratch']
  %s0 = inlined_call_operand.hbm [shape: f32[2,1,4,256], index: 0, kind: input, shape index: {}]
  %s1 = inlined_call_operand.vmem [shape: f32[2,1,4], index: 1, kind: input, shape index: {}]
  %s2 = inlined_call_operand.vmem [shape: f32[1,4], index: 2, kind: input, shape index: {}]
  %s3 = inlined_call_operand.vmem [shape: f32[1,4,1], index: 3, kind: input, shape index: {}]
  %s4 = inlined_call_operand.hbm [shape: f32[2,1,256], index: 4, kind: output, shape index: {0}]
  %s5 = inlined_call_operand.hbm [shape: f32[2,1,4], index: 5, kind: output, shape index: {1}]
  %6 = xla_tuple %s4, %s5
  %s7 = sld [smem:[#allocation0]]
  $region61: #{tpu_custom_call.1} parent=0
    _
  %s9 = ssub.s32 1, %s7
  %s10 = scalar_select 0, %s9, %s7
  $region1: #{tpu_custom_call.1} parent=0
    #allocation2 [shape = 'u8[8192]{0}', space=vmem, size = 0x2000, scoped, tag = 'input window, operand 0']
    #allocation3 [shape = 's32[2]{0}', space=sflag, size = 0x8, scoped, tag = 'scoped memory for tpu_custom_call.1']
    #allocation4 [shape = 's32[2]{0}', space=sflag, size = 0x8, scoped, tag = 'scoped memory for tpu_custom_call.1']
    #allocation5 [shape = 'u8[2048]{0}', space=vmem, size = 0x800, scoped, tag = 'output window, operand 0']
    #allocation6 [shape = 'u8[1024]{0}', space=vmem, size = 0x400, scoped, tag = 'output window, operand 1']
    #allocation7 [shape = 's32[2]{0}', space=sflag, size = 0x8, scoped, tag = 'scoped memory for tpu_custom_call.1']
    %11 = vsyncpa [#allocation3], 0
    %s12 = scalar_lea.sflag [#allocation3], 1
    %13 = vsyncpa %s12, 0
    %14 = vsyncpa [#allocation4], 0
    %s15 = scalar_lea.sflag [#allocation4], 1
    %16 = vsyncpa %s15, 0
    %17 = vsyncpa [#allocation7], 0
    %s18 = scalar_lea.sflag [#allocation7], 1
    %19 = vsyncpa %s18, 0
    loop: start=0, step=1, limit=4
    $region2: #{tpu_custom_call.1} parent=1 // loop_pre_header
      _
    $region3: #{tpu_custom_call.1} parent=1 // loop_header
      %s21 = sphi 0, %s25
      %p22 = scmp.ge.s32.totalorder %s21, 4
      %s31 = sphi 0, %s33
      %s34 = sphi 0, %s31
      %s35 = sphi 0, %s34
      %s51 = sphi 0, %s35
      %s57 = sphi 0, %s59
      %s60 = sphi 0, %s57
      %s61 = sphi 0, %s60
      %s77 = sphi 0, %s61
      %s81 = sphi 0, %s81
      %s83 = sphi 0, %s81
      %s84 = sphi 0, %s83
      %s98 = sphi 0, %s84
      %s102 = sphi 0, %s102
      %s104 = sphi 0, %s102
      %s105 = sphi 0, %s104
      %s119 = sphi 0, %s105
      %s125 = sphi 0, %s127
      %s128 = sphi 0, %s125
      %s129 = sphi 0, %s128
      %s145 = sphi 0, %s129
      %s151 = sphi 0, %s153
      %s154 = sphi 0, %s151
      %s155 = sphi 0, %s154
      %s171 = sphi 0, %s155
    $region4: #{tpu_custom_call.1} parent=1 // loop_header_branch
      %24 = sbr.rel (%p22) target = $region8
    $region5: #{tpu_custom_call.1} parent=1 // loop_body
      %s26 = ssub.s32 %s21, 1
      %s27 = ssub.s32 %s21, 2
      %s28 = sadd.s32 %s21, 1
      %s29 = ssub.s32 %s21, %s28
      %p30 = scmp.eq.s32.totalorder %s29, 0
      %s32 = sadd.s32 %s31, 1
      %s33 = scalar_select %p30, %s31, %s32
      %p36 = pneg %p30
      %p37 = scmp.eq.s32.totalorder %s21, 1
      %p38 = por %p36, %p37
      %p39 = scmp.ne.s32.totalorder %s31, %s34
      %p40 = scmp.eq.s32.totalorder %s21, 0
      %p41 = por %p39, %p40
      %p42 = scmp.ne.s32.totalorder %s31, %s34
      %p43 = scmp.eq.s32.totalorder %s26, 1
      %p44 = por %p42, %p43
      %p45 = scmp.ne.s32.totalorder %s34, %s35
      %p46 = scmp.eq.s32.totalorder %s26, 0
      %p47 = por %p45, %p46
      %p48 = scmp.ne.s32.totalorder %s34, %s35
      %p49 = scmp.eq.s32.totalorder %s27, 1
      %p50 = por %p48, %p49
      %p52 = scmp.ne.s32.totalorder %s35, %s51
      %p53 = scmp.eq.s32.totalorder %s27, 0
      %p54 = por %p52, %p53
      %s55 = ssub.s32 %s21, %s28
      %p56 = scmp.eq.s32.totalorder %s55, 0
      %s58 = sadd.s32 %s57, 1
      %s59 = scalar_select %p56, %s57, %s58
      %p62 = pneg %p56
      %p63 = scmp.eq.s32.totalorder %s21, 1
      %p64 = por %p62, %p63
      %p65 = scmp.ne.s32.totalorder %s57, %s60
      %p66 = scmp.eq.s32.totalorder %s21, 0
      %p67 = por %p65, %p66
      %p68 = scmp.ne.s32.totalorder %s57, %s60
      %p69 = scmp.eq.s32.totalorder %s26, 1
      %p70 = por %p68, %p69
      %p71 = scmp.ne.s32.totalorder %s60, %s61
      %p72 = scmp.eq.s32.totalorder %s26, 0
      %p73 = por %p71, %p72
      %p74 = scmp.ne.s32.totalorder %s60, %s61
      %p75 = scmp.eq.s32.totalorder %s27, 1
      %p76 = por %p74, %p75
      %p78 = scmp.ne.s32.totalorder %s61, %s77
      %p79 = scmp.eq.s32.totalorder %s27, 0
      %p80 = por %p78, %p79
      %s82 = sadd.s32 %s81, 1
      %p85 = scmp.eq.s32.totalorder %s21, 1
      %p86 = scmp.ne.s32.totalorder %s81, %s83
      %p87 = scmp.eq.s32.totalorder %s21, 0
      %p88 = por %p86, %p87
      %p89 = scmp.ne.s32.totalorder %s81, %s83
      %p90 = scmp.eq.s32.totalorder %s26, 1
      %p91 = por %p89, %p90
      %p92 = scmp.ne.s32.totalorder %s83, %s84
      %p93 = scmp.eq.s32.totalorder %s26, 0
      %p94 = por %p92, %p93
      %p95 = scmp.ne.s32.totalorder %s83, %s84
      %p96 = scmp.eq.s32.totalorder %s27, 1
      %p97 = por %p95, %p96
      %p99 = scmp.ne.s32.totalorder %s84, %s98
      %p100 = scmp.eq.s32.totalorder %s27, 0
      %p101 = por %p99, %p100
      %s103 = sadd.s32 %s102, 1
      %p106 = scmp.eq.s32.totalorder %s21, 1
      %p107 = scmp.ne.s32.totalorder %s102, %s104
      %p108 = scmp.eq.s32.totalorder %s21, 0
      %p109 = por %p107, %p108
      %p110 = scmp.ne.s32.totalorder %s102, %s104
      %p111 = scmp.eq.s32.totalorder %s26, 1
      %p112 = por %p110, %p111
      %p113 = scmp.ne.s32.totalorder %s104, %s105
      %p114 = scmp.eq.s32.totalorder %s26, 0
      %p115 = por %p113, %p114
      %p116 = scmp.ne.s32.totalorder %s104, %s105
      %p117 = scmp.eq.s32.totalorder %s27, 1
      %p118 = por %p116, %p117
      %p120 = scmp.ne.s32.totalorder %s105, %s119
      %p121 = scmp.eq.s32.totalorder %s27, 0
      %p122 = por %p120, %p121
      %s123 = ssub.s32 %s21, %s28
      %p124 = scmp.eq.s32.totalorder %s123, 0
      %s126 = sadd.s32 %s125, 1
      %s127 = scalar_select %p124, %s125, %s126
      %p130 = pneg %p124
      %p131 = scmp.eq.s32.totalorder %s21, 1
      %p132 = por %p130, %p131
      %p133 = scmp.ne.s32.totalorder %s125, %s128
      %p134 = scmp.eq.s32.totalorder %s21, 0
      %p135 = por %p133, %p134
      %p136 = scmp.ne.s32.totalorder %s125, %s128
      %p137 = scmp.eq.s32.totalorder %s26, 1
      %p138 = por %p136, %p137
      %p139 = scmp.ne.s32.totalorder %s128, %s129
      %p140 = scmp.eq.s32.totalorder %s26, 0
      %p141 = por %p139, %p140
      %p142 = scmp.ne.s32.totalorder %s128, %s129
      %p143 = scmp.eq.s32.totalorder %s27, 1
      %p144 = por %p142, %p143
      %p146 = scmp.ne.s32.totalorder %s129, %s145
      %p147 = scmp.eq.s32.totalorder %s27, 0
      %p148 = por %p146, %p147
      %s149 = ssub.s32 %s21, %s28
      %p150 = scmp.eq.s32.totalorder %s149, 0
      %s152 = sadd.s32 %s151, 1
      %s153 = scalar_select %p150, %s151, %s152
      %p156 = pneg %p150
      %p157 = scmp.eq.s32.totalorder %s21, 1
      %p158 = por %p156, %p157
      %p159 = scmp.ne.s32.totalorder %s151, %s154
      %p160 = scmp.eq.s32.totalorder %s21, 0
      %p161 = por %p159, %p160
      %p162 = scmp.ne.s32.totalorder %s151, %s154
      %p163 = scmp.eq.s32.totalorder %s26, 1
      %p164 = por %p162, %p163
      %p165 = scmp.ne.s32.totalorder %s154, %s155
      %p166 = scmp.eq.s32.totalorder %s26, 0
      %p167 = por %p165, %p166
      %p168 = scmp.ne.s32.totalorder %s154, %s155
      %p169 = scmp.eq.s32.totalorder %s27, 1
      %p170 = por %p168, %p169
      %p172 = scmp.ne.s32.totalorder %s155, %s171
      %p173 = scmp.eq.s32.totalorder %s27, 0
      %p174 = por %p172, %p173
      %p175 = scmp.le.s32.totalorder 1, %s21
      %p176 = scmp.lt.s32.totalorder %s21, 3
      %p177 = pnand %p175, %p176
      %p178 = pneg %p177
      // Predicated region
      $region9: #{tpu_custom_call.1} parent=5 // pred_check
        _
      $region10: #{tpu_custom_call.1} parent=5 // pred_check_branch
        %180 = sbr.rel (%p177) target = $region12
      $region11: #{tpu_custom_call.1} parent=5 // pred_region
        %s181 = ssub.s32 %s21, 1
        // Predicated region
        $region13: #{tpu_custom_call.1} parent=11 // pred_check
          %p182 = pneg %p94
        $region14: #{tpu_custom_call.1} parent=11 // pred_check_branch
          %184 = sbr.rel (%p182) target = $region16
        $region15: #{tpu_custom_call.1} parent=11 // pred_region
          _
        $region16: #{tpu_custom_call.1} parent=11 // pred_fallthru
          _
        // Predicated region
        $region17: #{tpu_custom_call.1} parent=11 // pred_check
          %p185 = pneg %p115
        $region18: #{tpu_custom_call.1} parent=11 // pred_check_branch
          %187 = sbr.rel (%p185) target = $region20
        $region19: #{tpu_custom_call.1} parent=11 // pred_region
          _
        $region20: #{tpu_custom_call.1} parent=11 // pred_fallthru
          _
      $region12: #{tpu_custom_call.1} parent=5 // pred_fallthru
        _
      %p188 = scmp.lt.s32.totalorder %s21, 2
      // Predicated region
      $region21: #{tpu_custom_call.1} parent=5 // pred_check
        %p189 = pneg %p188
      $region22: #{tpu_custom_call.1} parent=5 // pred_check_branch
        %191 = sbr.rel (%p189) target = $region24
      $region23: #{tpu_custom_call.1} parent=5 // pred_region
        // Predicated region
        $region25: #{tpu_custom_call.1} parent=23 // pred_check
          %p192 = pneg %p41
        $region26: #{tpu_custom_call.1} parent=23 // pred_check_branch
          %194 = sbr.rel (%p192) target = $region28
        $region27: #{tpu_custom_call.1} parent=23 // pred_region
          %s195 = sand.u32 %s31, 1
          %s196 = scalar_lea.sflag [#allocation3], %s195
          %s197 = sand.u32 %s31, 1
          %s198 = smul.addr %s197, 8
          %s199 = scalar_lea.vmem [#allocation2], %s198
          %s201 = ssub.s32 128, 128
          %202 = vsyncadd %s196, %s201
          %s203 = smul.addr %s21, 2
          %s204 = smul.addr %s203, 64
          %s205 = scalar_lea.hbm %s0, %s204
          %s207 = sshll.u32 %s199, 4
          %s208 = int_to_ptr.vmem [resolvable:$true] %s207
          %210 = dma.hbm_to_vmem [thread:$0]  %s205, 128, %s208, %s196
        $region28: #{tpu_custom_call.1} parent=23 // pred_fallthru
          _
        // Predicated region
        $region29: #{tpu_custom_call.1} parent=23 // pred_check
          %p211 = pneg %p67
        $region30: #{tpu_custom_call.1} parent=23 // pred_check_branch
          %213 = sbr.rel (%p211) target = $region32
        $region31: #{tpu_custom_call.1} parent=23 // pred_region
          %p214 = scmp.lt.s32.totalorder %s21, 1
          %s215 = scalar_select %p214, %s21, 1
          %s216 = scalar_lea.vmem %s1, %s215
        $region32: #{tpu_custom_call.1} parent=23 // pred_fallthru
          _
      $region24: #{tpu_custom_call.1} parent=5 // pred_fallthru
        _
      %p217 = scmp.le.s32.totalorder 1, %s21
      %p218 = scmp.lt.s32.totalorder %s21, 3
      %p219 = pnand %p217, %p218
      %p220 = pneg %p219
      // Predicated region
      $region33: #{tpu_custom_call.1} parent=5 // pred_check
        _
      $region34: #{tpu_custom_call.1} parent=5 // pred_check_branch
        %222 = sbr.rel (%p219) target = $region36
      $region35: #{tpu_custom_call.1} parent=5 // pred_region
        %s223 = ssub.s32 %s21, 1
        %s224 = sand.u32 %s34, 1
        %s225 = scalar_lea.sflag [#allocation3], %s224
        %s226 = sand.u32 %s34, 1
        %s227 = smul.addr %s226, 8
        %s228 = scalar_lea.vmem [#allocation2], %s227
        // Predicated region
        $region37: #{tpu_custom_call.1} parent=35 // pred_check
          %p229 = pneg %p47
        $region38: #{tpu_custom_call.1} parent=35 // pred_check_branch
          %231 = sbr.rel (%p229) target = $region40
        $region39: #{tpu_custom_call.1} parent=35 // pred_region
          %232 = dma.done %s225, 128
        $region40: #{tpu_custom_call.1} parent=35 // pred_fallthru
          _
        %s233 = sand.u32 %s34, 1
        %s234 = scalar_lea.sflag [#allocation3], %s233
        %s235 = sand.u32 %s34, 1
        %s236 = smul.addr %s235, 8
        %s237 = scalar_lea.vmem [#allocation2], %s236
        %p238 = pneg %p47
        %p239 = pneg %p44
        %p240 = scmp.lt.s32.totalorder %s26, 1
        %s241 = scalar_select %p240, %s26, 1
        %s242 = scalar_lea.vmem %s1, %s241
        %p243 = pneg %p73
        %p244 = pneg %p70
        %p245 = pneg %p94
        %p246 = pneg %p91
        %p247 = pneg %p115
        %p248 = pneg %p112
        %p249 = pneg %p141
        %p250 = pneg %p138
        %s251 = sand.u32 %s128, 1
        %s252 = scalar_lea.sflag [#allocation4], %s251
        %s253 = sand.u32 %s128, 1
        %s254 = smul.addr %s253, 2
        %s255 = scalar_lea.vmem [#allocation5], %s254
        %p256 = pneg %p167
        %p257 = pneg %p164
        %s258 = sand.u32 %s154, 1
        %s259 = scalar_lea.sflag [#allocation7], %s258
        %s260 = sand.u32 %s154, 1
        %s261 = scalar_lea.vmem [#allocation6], %s260
        %p262 = scmp.lt.s32.totalorder %s26, 1
        %s263 = scalar_select %p262, %s26, 1
        %s264 = scalar_lea.vmem %s1, %s263
        %v265 = vld [vmem:[%s228] sm:$0xff]
        %v266 = vld [vmem:[%s264] sm:$0x1]
        %v267 = vld [vmem:[%s2] sm:$0x1]
        %v268 = vld [vmem:[%s3] sm:$0xf]
        %v269 = vmul.f32 %v266, %v267
        %vm270 = vcmask 24576
        %v271 = vsel %vm270, %v269, 0.0
        %272 = vadd.xlane.f32.xlu0 %v271
        %v273 = vpop.xlane.xlu0 %272
        %275 = vset.pattern.permute.xlu0 0
        %276 = vperm.xlu0 %275, %v268
        %v277 = vpop.permute.xlu0 %276
        %v279 = vunpack.c.l.s4 839922192
        %v280 = vunpack.c.0.s8 %v279
        %v281 = vlaneseq
        %v282 = vshrl.u32 %v281, 7
        %v283 = vsub.s32 %v280, %v282
        %v284 = vrot.slane %v277, %v283
        %v286 = vmul.f32 %v265, %v284
        %v288 = vcombine.high %v286, %v286
        %vm290 = vcmask 1043456
        %v291 = vsel %vm290, %v286, 0.0
        %v292 = vrot.slane %v291, 4
        %v293 = vadd.f32 %v291, %v292
        %v294 = vrot.slane %v293, 2
        %v295 = vadd.f32 %v293, %v294
        %v296 = vrot.slane %v295, 1
        %v297 = vadd.f32 %v295, %v296
        %v298 = vsel %vm290, %v288, 0.0
        %v299 = vrot.slane %v298, 4
        %v300 = vadd.f32 %v298, %v299
        %v301 = vrot.slane %v300, 2
        %v302 = vadd.f32 %v300, %v301
        %v303 = vrot.slane %v302, 1
        %v304 = vadd.f32 %v302, %v303
        %v305 = vadd.f32 %v297, %v273
        %v306 = vadd.f32 %v304, %v273
        %vm307 = vcmask 1040384
        %v308 = vsel %vm307, %v305, -inf
        %v309 = vsel %vm307, %v306, -inf
        %v310 = vmax.f32 %v308, %v309
        %311 = vmax.xlane.f32.xlu0 %v310
        %v312 = vpop.xlane.xlu0 %311
        %v313 = vsub.f32 %v305, %v312
        %v314 = vsub.f32 %v306, %v312
        %v315 = vmul.f32 %v313, 1.442695
        %v316 = vpow.pop %v315
        %v317 = vmul.f32 %v314, 1.442695
        %v318 = vpow.pop %v317
        %v319 = vsel %vm307, %v316, 0.0
        %v320 = vsel %vm307, %v318, 0.0
        %v321 = vadd.f32 %v319, %v320
        %322 = vadd.xlane.f32.xlu0 %v321
        %v323 = vpop.xlane.xlu0 %322
        %v324 = vlaneseq
        %v325 = vshrl.u32 %v324, 7
        %v326 = vsub.s32 0, %v325
        %v327 = vrot.slane %v316, %v326
        %v328 = vlaneseq
        %v329 = vshrl.u32 %v328, 7
        %v330 = vsub.s32 0, %v329
        %v331 = vrot.slane %v318, %v330
        %v334 = vcombine.low %v327, %v331
        %v336 = vmul.f32 %v265, %v334
        %v338 = vcombine.high %v336, %v336
        %v340 = vsel %vm290, %v336, 0.0
        %v341 = vsel %vm290, %v338, 0.0
        %v342 = vadd.f32 %v340, %v341
        %343 = vadd.xlane.f32.xlu0 %v342
        %v344 = vpop.xlane.xlu0 %343
        %v345 = vrcp.pop %v323
        %v347 = vlaneseq
        %v348 = vshrl.u32 %v347, 7
        %v349 = vsub.s32 0, %v348
        %v350 = vrot.slane %v345, %v349
        %v352 = vmul.f32 %v344, %v350
        %v355 = vcombine.low %v305, %v306
        %v357 = vunpack.c.l.s4 1966171168
        %v358 = vunpack.c.0.s8 %v357
        %v359 = vlaneseq
        %v360 = vshrl.u32 %v359, 7
        %v361 = vsub.s32 %v358, %v360
        %v362 = vrot.slane %v355, %v361
        %v364 = vunpack.c.l.s4 1966171168
        %v365 = vunpack.c.0.s8 %v364
        %v366 = vlaneseq
        %v367 = vshrl.u32 %v366, 7
        %v368 = vsub.s32 %v365, %v367
        %v369 = vrot.slane %v362, %v368
        %v371 = vlaneseq
        %vm372 = vcmp.ge.s32.totalorder %v371, 0
        %vm373 = vcmp.lt.s32.totalorder %v371, 256
        %vm374 = vmand %vm372, %vm373
        %375 = vst.msk [vmem:[%s255] sm:$0x3] %vm374, %v369
        %377 = vset.pattern.permute.xlu0 0
        %378 = vperm.xlu0 %377, %v352
        %v379 = vpop.permute.xlu0 %378
        %v380 = vlaneseq
        %v381 = vand.u32 %v380, 127
        %v382 = vlaneseq
        %v383 = vshrl.u32 %v382, 7
        %v384 = vsub.s32 %v381, %v383
        %v385 = vrot.slane %v379, %v384
        %387 = vst.msk [vmem:[%s261] sm:$0x1] %vm270, %v385
        %s388 = sand.u32 %s128, 1
        %s389 = scalar_lea.sflag [#allocation4], %s388
        %s390 = sand.u32 %s128, 1
        %s391 = smul.addr %s390, 2
        %s392 = scalar_lea.vmem [#allocation5], %s391
        %s393 = sand.u32 %s154, 1
        %s394 = scalar_lea.sflag [#allocation7], %s393
        %s395 = sand.u32 %s154, 1
        %s396 = scalar_lea.vmem [#allocation6], %s395
        // Predicated region
        $region41: #{tpu_custom_call.1} parent=35 // pred_check
          %p397 = pneg %p138
        $region42: #{tpu_custom_call.1} parent=35 // pred_check_branch
          %399 = sbr.rel (%p397) target = $region44
        $region43: #{tpu_custom_call.1} parent=35 // pred_region
          %s401 = ssub.s32 32, 32
          %402 = vsyncadd %s389, %s401
          %s403 = smul.addr %s26, 2
          %s404 = smul.addr %s403, 16
          %s405 = scalar_lea.hbm %s4, %s404
          %s407 = sshll.u32 %s392, 4
          %s408 = int_to_ptr.vmem [resolvable:$true] %s407
          %410 = dma.vmem_to_hbm [thread:$0]  %s408, 32, %s405, %s389
        $region44: #{tpu_custom_call.1} parent=35 // pred_fallthru
          _
        // Predicated region
        $region45: #{tpu_custom_call.1} parent=35 // pred_check
          %p411 = pneg %p164
        $region46: #{tpu_custom_call.1} parent=35 // pred_check_branch
          %413 = sbr.rel (%p411) target = $region48
        $region47: #{tpu_custom_call.1} parent=35 // pred_region
          %s415 = ssub.s32 16, 16
          %416 = vsyncadd %s394, %s415
          %s417 = smul.addr %s26, 16
          %s418 = scalar_lea.hbm %s5, %s417
          %s420 = sshll.u32 %s396, 4
          %s421 = int_to_ptr.vmem [resolvable:$true] %s420
          %423 = dma.vmem_to_hbm [thread:$0]  %s421, 16, %s418, %s394
        $region48: #{tpu_custom_call.1} parent=35 // pred_fallthru
          _
      $region36: #{tpu_custom_call.1} parent=5 // pred_fallthru
        _
      %p424 = scmp.le.s32.totalorder 2, %s21
      // Predicated region
      $region49: #{tpu_custom_call.1} parent=5 // pred_check
        %p425 = pneg %p424
      $region50: #{tpu_custom_call.1} parent=5 // pred_check_branch
        %427 = sbr.rel (%p425) target = $region52
      $region51: #{tpu_custom_call.1} parent=5 // pred_region
        %s428 = ssub.s32 %s21, 2
        // Predicated region
        $region53: #{tpu_custom_call.1} parent=51 // pred_check
          %p429 = pneg %p144
        $region54: #{tpu_custom_call.1} parent=51 // pred_check_branch
          %431 = sbr.rel (%p429) target = $region56
        $region55: #{tpu_custom_call.1} parent=51 // pred_region
          %s432 = sand.u32 %s129, 1
          %s433 = scalar_lea.sflag [#allocation4], %s432
          %s434 = sand.u32 %s129, 1
          %s435 = smul.addr %s434, 2
          %s436 = scalar_lea.vmem [#allocation5], %s435
          %437 = dma.done %s433, 32
        $region56: #{tpu_custom_call.1} parent=51 // pred_fallthru
          _
        // Predicated region
        $region57: #{tpu_custom_call.1} parent=51 // pred_check
          %p438 = pneg %p170
        $region58: #{tpu_custom_call.1} parent=51 // pred_check_branch
          %440 = sbr.rel (%p438) target = $region60
        $region59: #{tpu_custom_call.1} parent=51 // pred_region
          %s441 = sand.u32 %s155, 1
          %s442 = scalar_lea.sflag [#allocation7], %s441
          %s443 = sand.u32 %s155, 1
          %s444 = scalar_lea.vmem [#allocation6], %s443
          %445 = dma.done %s442, 16
        $region60: #{tpu_custom_call.1} parent=51 // pred_fallthru
          _
      $region52: #{tpu_custom_call.1} parent=5 // pred_fallthru
        _
    $region6: #{tpu_custom_call.1} parent=1 // loop_footer
      %s25 = sadd.s32 1, %s21
    $region7: #{tpu_custom_call.1} parent=1 // loop_footer_branch
      %20 = sbr.rel target = $region3
    $region8: #{tpu_custom_call.1} parent=1 // loop_exit
      _
    %446 = vsyncpa [#allocation3], 1
    %s447 = scalar_lea.sflag [#allocation3], 1
    %448 = vsyncpa %s447, 1
    %449 = vsyncpa [#allocation4], 1
    %s450 = scalar_lea.sflag [#allocation4], 1
    %451 = vsyncpa %s450, 1
    %452 = vsyncpa [#allocation7], 1
    %s453 = scalar_lea.sflag [#allocation7], 1
    %454 = vsyncpa %s453, 1

</llo_original>
